<compile_context>
chip_gen: v7x
topology: tpu7x:2x2x1
jax: 0.10.0
libtpu: 0.0.40
codegen_flags: <defaults>
</compile_context>

<pallas_src>
import jax
import jax.numpy as jnp
from jax.experimental import pallas as pl
from jax.experimental.pallas import tpu as pltpu


# ----------------------------- planning helpers ---------------------------- #

def _round_up(x, m):
    return (x + m - 1) // m * m


def _plan_rows(R, F, dtype_bytes):
    """Row tile: ~4 MiB of output per grid step, clamped to [512, 4096] rows,
    never larger than needed, multiple of 8.  When possible expose >= 2 grid
    steps so v7x's two TensorCores both get work ("parallel" axis)."""
    target_bytes = 4 * 1024 * 1024
    tm = max(512, min(4096, target_bytes // max(1, F * dtype_bytes)))
    tm = _round_up(min(tm, R), 8)
    while pl.cdiv(R, tm) < 2 and tm > 512:
        tm = _round_up(max(tm // 2, 8), 8)
    return tm, pl.cdiv(R, tm)


def _vmem_cap_bytes():
    try:
        return int(pltpu.get_tpu_info().vmem_capacity_bytes)
    except Exception:
        return 64 * 1024 * 1024   # conservative (v7x per-TC VMEM)


def _compiler_params(stream_bytes_per_step, resident_bytes):
    # 2x each streamed block (double-buffered pipeline) + single-buffered
    # resident weights + headroom for compiler scratch, capped below the
    # physical VMEM of the current generation.
    need = 2 * stream_bytes_per_step + resident_bytes + 4 * 1024 * 1024
    limit = int(min(max(need, 16 * 1024 * 1024), int(_vmem_cap_bytes() * 0.85)))
    return pltpu.CompilerParams(
        dimension_semantics=("parallel",),
        vmem_limit_bytes=limit,
    )


# --------------------------------- kernels --------------------------------- #

def _cat_kernel(v_ref, i_ref, o_ref):
    # out = concat(v, i) along the feature (lane) axis; two static half stores,
    # no in-kernel concatenate temp.
    F2 = v_ref.shape[-1]
    o_ref[:, :F2] = v_ref[...]
    o_ref[:, F2:] = i_ref[...]


def _soft_kernel(v_ref, i_ref, wv_ref, wi_ref, b_ref, o_ref):
    # weights = Linear(concat(v, i));  out = concat(v, i) * weights
    # Split contraction so the concat never exists:
    #   concat(v, i) @ Wt == v @ Wt[:F2] + i @ Wt[F2:]
    F2 = v_ref.shape[-1]
    v = v_ref[...]
    i = i_ref[...]
    w = (jnp.dot(v, wv_ref[...], preferred_element_type=jnp.float32)
         + jnp.dot(i, wi_ref[...], preferred_element_type=jnp.float32)
         + b_ref[...])
    w = w.astype(o_ref.dtype)
    o_ref[:, :F2] = v * w[:, :F2]
    o_ref[:, F2:] = i * w[:, F2:]


def _hard_kernel(v_ref, i_ref, wdv_ref, wdi_ref, thr_ref, o_ref):
    # Gumbel-softmax(tau=1, hard=True) forward mask along the size-2 axis:
    #   mask[..., 0] == 1  iff  feat @ (W0 - W1)^T >= (g1 - g0) - (b0 - b1)
    # Single difference matmul; bias diff folded into the streamed threshold;
    # select and multiply fused into one jnp.where per half.
    F2 = v_ref.shape[-1]
    v = v_ref[...]
    i = i_ref[...]
    d = (jnp.dot(v, wdv_ref[...], preferred_element_type=jnp.float32)
         + jnp.dot(i, wdi_ref[...], preferred_element_type=jnp.float32))
    keep = d >= thr_ref[...]
    o_ref[:, :F2] = jnp.where(keep[:, :F2], v, jnp.zeros_like(v)).astype(o_ref.dtype)
    o_ref[:, F2:] = jnp.where(keep[:, F2:], i, jnp.zeros_like(i)).astype(o_ref.dtype)


# -------------------------------- wrappers --------------------------------- #

def fusion_cat(v, i):
    B, S, F2 = v.shape
    F = 2 * F2
    R = B * S
    dtype = v.dtype
    nbytes = jnp.dtype(dtype).itemsize
    tm, nt = _plan_rows(R, F, nbytes)
    stream = (2 * tm * F2 + tm * F) * nbytes
    out = pl.pallas_call(
        _cat_kernel,
        out_shape=jax.ShapeDtypeStruct((R, F), dtype),
        grid=(nt,),
        in_specs=[pl.BlockSpec((tm, F2), lambda r: (r, 0)),
                  pl.BlockSpec((tm, F2), lambda r: (r, 0))],
        out_specs=pl.BlockSpec((tm, F), lambda r: (r, 0)),
        compiler_params=_compiler_params(stream, 0),
    )(v.reshape(R, F2), i.reshape(R, F2))
    return out.reshape(B, S, F)


def fusion_soft(v, i, W, b):
    """W: (F, F) torch-style (out, in) Linear weight; b: (F,)."""
    B, S, F2 = v.shape
    F = 2 * F2
    R = B * S
    dtype = v.dtype
    nbytes = jnp.dtype(dtype).itemsize
    tm, nt = _plan_rows(R, F, nbytes)

    Wt = jnp.asarray(W, dtype).T            # (in=F, out=F) so feat @ Wt
    Wv = Wt[:F2]                            # (F2, F)  rows consumed by v
    Wi = Wt[F2:]                            # (F2, F)  rows consumed by i
    b2 = jnp.asarray(b, jnp.float32).reshape(1, F)

    stream = (2 * tm * F2 + tm * F) * nbytes           # v, i, out per step
    resident = 2 * F2 * F * nbytes + F * 4             # Wv, Wi, bias (1 buffer)
    out = pl.pallas_call(
        _soft_kernel,
        out_shape=jax.ShapeDtypeStruct((R, F), dtype),
        grid=(nt,),
        in_specs=[
            pl.BlockSpec((tm, F2), lambda r: (r, 0)),
            pl.BlockSpec((tm, F2), lambda r: (r, 0)),
            pl.BlockSpec((F2, F), lambda r: (0, 0), pipeline_mode=pl.Buffered(1)),
            pl.BlockSpec((F2, F), lambda r: (0, 0), pipeline_mode=pl.Buffered(1)),
            pl.BlockSpec((1, F), lambda r: (0, 0), pipeline_mode=pl.Buffered(1)),
        ],
        out_specs=pl.BlockSpec((tm, F), lambda r: (r, 0)),
        compiler_params=_compiler_params(stream, resident),
    )(v.reshape(R, F2), i.reshape(R, F2), Wv, Wi, b2)
    return out.reshape(B, S, F)


def fusion_hard(v, i, W, b, gumbel):
    """W: (2F, F) torch-style Linear weight; b: (2F,); gumbel: (B, S, F, 2).

    The gumbel noise (sampled host-side with JAX) stands in for the samples
    F.gumbel_softmax would draw internally; forward semantics (hard argmax
    one-hot mask) are reproduced exactly given the same noise.
    """
    B, S, F2 = v.shape
    F = 2 * F2
    R = B * S
    dtype = v.dtype
    nbytes = jnp.dtype(dtype).itemsize
    tm, nt = _plan_rows(R, F, nbytes)

    Wf = jnp.asarray(W, dtype)
    bf = jnp.asarray(b, jnp.float32)
    # weights.view(B, S, F, 2): element (f, j) comes from Linear output 2f+j.
    # Fuse the two logit matmuls into ONE difference matmul; fold the bias
    # difference into the per-element threshold (fused into the gumbel prep).
    Wd = (Wf[0::2] - Wf[1::2]).T                         # (in=F, out=F)
    Wdv = Wd[:F2]                                        # (F2, F)
    Wdi = Wd[F2:]                                        # (F2, F)
    bd = (bf[0::2] - bf[1::2]).reshape(1, F)
    thr = ((gumbel[..., 1] - gumbel[..., 0]).reshape(R, F) - bd).astype(jnp.float32)
    # TODO(synk): thr could be generated in-kernel via pltpu.prng_seed /
    # prng_random_bits to drop this (R, F) HBM stream entirely, at the cost of
    # a different (non-reproducible vs. host) noise stream.

    stream = 2 * tm * F2 * nbytes + tm * F * 4 + tm * F * nbytes  # v, i, thr, out
    resident = 2 * F2 * F * nbytes                                # Wdv, Wdi
    out = pl.pallas_call(
        _hard_kernel,
        out_shape=jax.ShapeDtypeStruct((R, F), dtype),
        grid=(nt,),
        in_specs=[
            pl.BlockSpec((tm, F2), lambda r: (r, 0)),
            pl.BlockSpec((tm, F2), lambda r: (r, 0)),
            pl.BlockSpec((F2, F), lambda r: (0, 0), pipeline_mode=pl.Buffered(1)),
            pl.BlockSpec((F2, F), lambda r: (0, 0), pipeline_mode=pl.Buffered(1)),
            pl.BlockSpec((tm, F), lambda r: (r, 0)),
        ],
        out_specs=pl.BlockSpec((tm, F), lambda r: (r, 0)),
        compiler_params=_compiler_params(stream, resident),
    )(v.reshape(R, F2), i.reshape(R, F2), Wdv, Wdi, thr)
    return out.reshape(B, S, F)
    # TODO(synk): straight-through gradient of gumbel_softmax(hard=True) is not
    # reproduced (forward-only kernel).


# ---------------------------------- main ------------------------------------ #

if __name__ == "__main__":
    key = jax.random.PRNGKey(0)
    B, S, F = 2, 8, 32          # feature_dim (concatenated length) = F
    F2 = F // 2
    kv, ki, kw, kb, kw2, kb2, kg = jax.random.split(key, 7)

    v = jax.random.normal(kv, (B, S, F2), jnp.float32)
    i = jax.random.normal(ki, (B, S, F2), jnp.float32)

    # Deterministic parameter init (PyTorch Linear-style uniform bounds).
    bound = 1.0 / (F ** 0.5)
    W_soft = jax.random.uniform(kw, (F, F), jnp.float32, -bound, bound)
    b_soft = jax.random.uniform(kb, (F,), jnp.float32, -bound, bound)
    W_hard = jax.random.uniform(kw2, (2 * F, F), jnp.float32, -bound, bound)
    b_hard = jax.random.uniform(kb2, (2 * F,), jnp.float32, -bound, bound)
    gumbel = jax.random.gumbel(kg, (B, S, F, 2), jnp.float32)

    out_cat = fusion_cat(v, i)
    out_soft = fusion_soft(v, i, W_soft, b_soft)
    out_hard = fusion_hard(v, i, W_hard, b_hard, gumbel)
    jax.block_until_ready((out_cat, out_soft, out_hard))

    # Pure-JAX references (mirror the PyTorch forward).
    feat = jnp.concatenate([v, i], axis=-1)
    ref_cat = feat
    ref_soft = feat * (feat @ W_soft.T + b_soft)
    logits = (feat @ W_hard.T + b_hard).reshape(B, S, F, 2) + gumbel
    mask0 = (logits[..., 0] >= logits[..., 1]).astype(feat.dtype)
    ref_hard = feat * mask0
    # Exclude numerically-ambiguous near-ties (the kernel's fused difference
    # matmul is mathematically equivalent but not bit-identical).
    margin_ok = jnp.abs(logits[..., 0] - logits[..., 1]) > 1e-4

    assert out_cat.shape == (B, S, F)
    assert out_soft.shape == (B, S, F)
    assert out_hard.shape == (B, S, F)
    assert jnp.allclose(out_cat, ref_cat, atol=1e-6)
    assert jnp.allclose(out_soft, ref_soft, atol=1e-5, rtol=1e-5)
    assert jnp.allclose(jnp.where(margin_ok, out_hard, 0.0),
                        jnp.where(margin_ok, ref_hard, 0.0),
                        atol=1e-5, rtol=1e-5)

    print("KERNEL_OK")
</pallas_src>

<mosaic_0001>
module attributes {stable_mosaic.version = 11 : i64} {
  func.func @_cat_kernel(%arg0: i32, %arg1: memref<16x16xf32, #tpu.memory_space<vmem>>, %arg2: memref<16x16xf32, #tpu.memory_space<vmem>>, %arg3: memref<16x32xf32, #tpu.memory_space<vmem>>) attributes {dimension_semantics = [#tpu.dimension_semantics<parallel>], iteration_bounds = array<i64: 1>, scalar_prefetch = 0 : i64, scratch_operands = 0 : i64, tpu.core_type = #tpu.core_type<tc>, window_params = [{transform_indices = @transform_0, window_bounds = array<i64: 16, 16>}, {transform_indices = @transform_1, window_bounds = array<i64: 16, 16>}, {transform_indices = @transform_2, window_bounds = array<i64: 16, 32>}]} {
    %c0 = arith.constant 0 : index
    %c0_0 = arith.constant 0 : index
    %0 = vector.load %arg1[%c0, %c0_0] : memref<16x16xf32, #tpu.memory_space<vmem>>, vector<16x16xf32>
    %c0_1 = arith.constant 0 : index
    %c0_2 = arith.constant 0 : index
    %1 = vector.load %arg3[%c0_1, %c0_2] : memref<16x32xf32, #tpu.memory_space<vmem>>, vector<16x16xf32>
    tpu.vector_store %arg3[%c0_1, %c0_2], %0 {strides = array<i32>} : memref<16x32xf32, #tpu.memory_space<vmem>>, vector<16x16xf32>,
    %c0_3 = arith.constant 0 : index
    %c0_4 = arith.constant 0 : index
    %2 = vector.load %arg2[%c0_3, %c0_4] : memref<16x16xf32, #tpu.memory_space<vmem>>, vector<16x16xf32>
    %c0_5 = arith.constant 0 : index
    %c16 = arith.constant 16 : index
    %3 = vector.load %arg3[%c0_5, %c16] : memref<16x32xf32, #tpu.memory_space<vmem>>, vector<16x16xf32>
    tpu.vector_store %arg3[%c0_5, %c16], %2 {strides = array<i32>} : memref<16x32xf32, #tpu.memory_space<vmem>>, vector<16x16xf32>,
    return
  }
  func.func @transform_0(%arg0: i32) -> (i32, i32) {
    %c0_i32 = arith.constant 0 : i32
    %c0_i32_0 = arith.constant 0 : i32
    return %arg0, %c0_i32 : i32, i32
  }
  func.func @transform_1(%arg0: i32) -> (i32, i32) {
    %c0_i32 = arith.constant 0 : i32
    %c0_i32_0 = arith.constant 0 : i32
    return %arg0, %c0_i32 : i32, i32
  }
  func.func @transform_2(%arg0: i32) -> (i32, i32) {
    %c0_i32 = arith.constant 0 : i32
    %c0_i32_0 = arith.constant 0 : i32
    return %arg0, %c0_i32 : i32, i32
  }
}

</mosaic_0001>

<llo_original>
// kernel: tpu_custom_call.1
$region0: #{tpu_custom_call.1}
  #allocation0 [shape = 'u32[]', space=smem, size = 0x4, offset = 0x4, fixed_abs, tag = 'smem constant byte address 0x4 - core index']
  #allocation1 [shape = 'u32[144,128]{1,0:T(1,128)}', space=vmem, size = 0x12000, scoped, tag = 'internal scratch']
  %s0 = inlined_call_operand.hbm [shape: f32[16,16], index: 0, kind: input, shape index: {}]
  %s1 = inlined_call_operand.hbm [shape: f32[16,16], index: 1, kind: input, shape index: {}]
  %s2 = inlined_call_operand.hbm [shape: f32[16,32], index: 2, kind: output, shape index: {}]
  %s3 = sld [smem:[#allocation0]]
  $region26: #{tpu_custom_call.1} parent=0
    _
  %s5 = ssub.s32 1, %s3
  %s6 = scalar_select 0, %s5, %s3
  $region1: #{tpu_custom_call.1} parent=0
    #allocation2 [shape = 'u8[8192]{0}', space=vmem, size = 0x2000, scoped, tag = 'input window, operand 0, single buffered']
    #allocation3 [shape = 's32[1]{0}', space=sflag, size = 0x4, scoped, tag = 'scoped memory for tpu_custom_call.1']
    #allocation4 [shape = 's32[1]{0}', space=sflag, size = 0x4, scoped, tag = 'scoped memory for tpu_custom_call.1']
    #allocation5 [shape = 'u8[8192]{0}', space=vmem, size = 0x2000, scoped, tag = 'input window, operand 1, single buffered']
    #allocation6 [shape = 's32[1]{0}', space=sflag, size = 0x4, scoped, tag = 'scoped memory for tpu_custom_call.1']
    #allocation7 [shape = 'u8[8192]{0}', space=vmem, size = 0x2000, scoped, tag = 'output window, operand 0, single buffered']
    %7 = vsyncpa [#allocation3], 0
    %8 = vsyncpa [#allocation6], 0
    %9 = vsyncpa [#allocation4], 0
    // Predicated region
    $region2: #{tpu_custom_call.1} parent=1 // pred_check
      _
    $region3: #{tpu_custom_call.1} parent=1 // pred_check_branch
      %11 = sbr.rel (0) target = $region5
    $region4: #{tpu_custom_call.1} parent=1 // pred_region
      %s13 = ssub.s32 256, 256
      %14 = vsyncadd [#allocation3], %s13
      %s15 = sshll.u32 [#allocation2], 4
      %s16 = int_to_ptr.vmem [resolvable:$true] %s15
      %21 = dma.hbm_to_vmem [thread:$0]  %s0, 256, %s16, [#allocation3], 128, 128, 8
    $region5: #{tpu_custom_call.1} parent=1 // pred_fallthru
      _
    // Predicated region
    $region6: #{tpu_custom_call.1} parent=1 // pred_check
      _
    $region7: #{tpu_custom_call.1} parent=1 // pred_check_branch
      %23 = sbr.rel (0) target = $region9
    $region8: #{tpu_custom_call.1} parent=1 // pred_region
      %s25 = ssub.s32 256, 256
      %26 = vsyncadd [#allocation6], %s25
      %s27 = sshll.u32 [#allocation5], 4
      %s28 = int_to_ptr.vmem [resolvable:$true] %s27
      %33 = dma.hbm_to_vmem [thread:$0]  %s1, 256, %s28, [#allocation6], 128, 128, 8
    $region9: #{tpu_custom_call.1} parent=1 // pred_fallthru
      _
    // Predicated region
    $region10: #{tpu_custom_call.1} parent=1 // pred_check
      _
    $region11: #{tpu_custom_call.1} parent=1 // pred_check_branch
      %35 = sbr.rel (0) target = $region13
    $region12: #{tpu_custom_call.1} parent=1 // pred_region
      %36 = dma.done [#allocation3], 256
    $region13: #{tpu_custom_call.1} parent=1 // pred_fallthru
      _
    // Predicated region
    $region14: #{tpu_custom_call.1} parent=1 // pred_check
      _
    $region15: #{tpu_custom_call.1} parent=1 // pred_check_branch
      %38 = sbr.rel (0) target = $region17
    $region16: #{tpu_custom_call.1} parent=1 // pred_region
      %39 = dma.done [#allocation6], 256
    $region17: #{tpu_custom_call.1} parent=1 // pred_fallthru
      _
    %v40 = vld [vmem:[#allocation2] sm:$0xff]
    %v41 = vld [vmem:[#allocation2 + $0x8] sm:$0xff]
    %vm42 = vcmask 130048
    %43 = vst.msk [vmem:[#allocation7] sm:$0xff] %vm42, %v40
    %44 = vst.msk [vmem:[#allocation7 + $0x8] sm:$0xff] %vm42, %v41
    %v45 = vld [vmem:[#allocation5] sm:$0xff]
    %v46 = vld [vmem:[#allocation5 + $0x8] sm:$0xff]
    %49 = vrot.lane.b32.xlu0 %v45, 16
    %v50 = vpop.permute.xlu0 %49
    %51 = vrot.lane.b32.xlu0 %v46, 16
    %v52 = vpop.permute.xlu0 %51
    %vm55 = vcmask 261248
    %56 = vst.msk [vmem:[#allocation7] sm:$0xff] %vm55, %v50
    %57 = vst.msk [vmem:[#allocation7 + $0x8] sm:$0xff] %vm55, %v52
    // Predicated region
    $region18: #{tpu_custom_call.1} parent=1 // pred_check
      _
    $region19: #{tpu_custom_call.1} parent=1 // pred_check_branch
      %59 = sbr.rel (0) target = $region21
    $region20: #{tpu_custom_call.1} parent=1 // pred_region
      %s61 = ssub.s32 256, 256
      %62 = vsyncadd [#allocation4], %s61
      %s63 = sshll.u32 [#allocation7], 4
      %s64 = int_to_ptr.vmem [resolvable:$true] %s63
      %69 = dma.vmem_to_hbm [thread:$0]  %s64, 256, %s2, [#allocation4], 128, 128, 8
    $region21: #{tpu_custom_call.1} parent=1 // pred_fallthru
      _
    // Predicated region
    $region22: #{tpu_custom_call.1} parent=1 // pred_check
      _
    $region23: #{tpu_custom_call.1} parent=1 // pred_check_branch
      %71 = sbr.rel (0) target = $region25
    $region24: #{tpu_custom_call.1} parent=1 // pred_region
      %72 = dma.done [#allocation4], 256
    $region25: #{tpu_custom_call.1} parent=1 // pred_fallthru
      _
    %73 = vsyncpa [#allocation3], 1
    %74 = vsyncpa [#allocation6], 1
    %75 = vsyncpa [#allocation4], 1

</llo_original>
